<compile_context>
chip_gen: v6e
topology: v6e:2x2x1
jax: 0.10.0
libtpu: 0.0.40
codegen_flags: <defaults>
</compile_context>

<pallas_src>
import functools

import jax
import jax.numpy as jnp
from jax.experimental import pallas as pl
from jax.experimental.pallas import tpu as pltpu


def _distill_kl_kernel(ys_ref, yt_ref, rowkl_ref, *, inv_t):
    # Load a [TB, C] tile of student / teacher logits, cast to f32, scale 1/T.
    inv_t = jnp.float32(inv_t)
    ys = ys_ref[...].astype(jnp.float32) * inv_t
    yt = yt_ref[...].astype(jnp.float32) * inv_t

    # Row-wise max shift for numerical stability (class axis = lane axis).
    ys_shift = ys - jnp.max(ys, axis=-1, keepdims=True)
    yt_shift = yt - jnp.max(yt, axis=-1, keepdims=True)

    ys_sum = jnp.sum(jnp.exp(ys_shift), axis=-1, keepdims=True)  # [TB, 1]
    yt_exp = jnp.exp(yt_shift)                                   # [TB, C]
    yt_sum = jnp.sum(yt_exp, axis=-1, keepdims=True)             # [TB, 1]

    # Fused per-row KL term:
    #   sum_c p_t*(log p_t - log p_s)
    #     = [sum_c yt_exp*(yt_shift - ys_shift)] / yt_sum
    #       + log(ys_sum) - log(yt_sum)
    rowdot = jnp.sum(yt_exp * (yt_shift - ys_shift), axis=-1, keepdims=True)
    rowkl_ref[...] = (rowdot * pl.reciprocal(yt_sum)
                      + jnp.log(ys_sum) - jnp.log(yt_sum))


def _round_up(x, m):
    return ((x + m - 1) // m) * m


def _auto_batch_tile(B, C, itemsize):
    """VMEM-budget-aware batch tile (multiple of 8 rows)."""
    # Per tile row: 2 inputs x 2 pipeline buffers x itemsize, plus ~4 live
    # [TB, C] f32 in-kernel temporaries.
    per_row = C * (2 * 2 * itemsize + 4 * 4)
    budget = 24 * 1024 * 1024  # conservative: fits v5e/v6e/v7x scoped VMEM
    tile = budget // max(per_row, 1)
    tile = min(tile, 1024)  # diminishing returns past ~1k rows per step
    # Keep >= ~4 grid steps when the batch allows it so BlockSpec
    # double-buffering (and v7x's 2 TensorCores) have work to overlap / split.
    tile = min(tile, _round_up(pl.cdiv(B, 4), 8))
    return max(8, (tile // 8) * 8)


def distill_kl(y_s, y_t, temperature, *, batch_tile=None):
    """Pallas-TPU DistillKL forward. y_s, y_t: [B, C] logits. Returns scalar f32."""
    assert y_s.shape == y_t.shape and y_s.ndim == 2
    B, C = y_s.shape
    itemsize = jnp.dtype(y_s.dtype).itemsize

    if batch_tile is None:
        batch_tile = _auto_batch_tile(B, C, itemsize)
    assert batch_tile % 8 == 0 or batch_tile == B, (
        "batch_tile must be a multiple of 8 (sublane constraint) or equal B")

    # Pad the batch so it divides evenly into tiles.  Zero rows in both inputs
    # contribute exactly 0 to the KL sum (identical uniform distributions).
    B_pad = _round_up(B, batch_tile)
    if B_pad != B:
        pad = ((0, B_pad - B), (0, 0))
        y_s = jnp.pad(y_s, pad)
        y_t = jnp.pad(y_t, pad)
    num_tiles = B_pad // batch_tile

    kernel = functools.partial(_distill_kl_kernel, inv_t=1.0 / float(temperature))

    # Explicit VMEM limit sized to the actual footprint (inputs are
    # double-buffered by the pipeline), capped below v7x's physical VMEM.
    in_bytes = 2 * 2 * batch_tile * C * itemsize
    tmp_bytes = 6 * batch_tile * C * 4
    vmem_limit = min(int(1.2 * (in_bytes + tmp_bytes)) + (2 << 20), 48 * 1024 * 1024)
    vmem_limit = max(vmem_limit, 16 * 1024 * 1024)

    cost = pl.CostEstimate(
        flops=10 * B_pad * C,
        transcendentals=2 * B_pad * C,
        bytes_accessed=2 * B_pad * C * itemsize + B_pad * 4,
    )

    row_kl = pl.pallas_call(
        kernel,
        out_shape=jax.ShapeDtypeStruct((B_pad, 1), jnp.float32),
        grid_spec=pltpu.PrefetchScalarGridSpec(
            num_scalar_prefetch=0,
            grid=(num_tiles,),
            in_specs=[
                pl.BlockSpec((batch_tile, C), lambda i: (i, 0)),
                pl.BlockSpec((batch_tile, C), lambda i: (i, 0)),
            ],
            out_specs=pl.BlockSpec((batch_tile, 1), lambda i: (i, 0)),
        ),
        compiler_params=pltpu.CompilerParams(
            dimension_semantics=("parallel",),
            vmem_limit_bytes=vmem_limit,
        ),
        cost_estimate=cost,
    )(y_s, y_t)

    # Tiny final reduction + scaling in plain JAX: per-tile/per-row partials
    # keep the grid axis parallel and avoid a carried SMEM accumulator.
    t = jnp.float32(temperature)
    return jnp.sum(row_kl) * t * t / jnp.float32(B)


def _distill_kl_ref(y_s, y_t, temperature):
    t = jnp.float32(temperature)
    log_p_s = jax.nn.log_softmax(y_s.astype(jnp.float32) / t, axis=1)
    p_t = jax.nn.softmax(y_t.astype(jnp.float32) / t, axis=1)
    log_p_t = jax.nn.log_softmax(y_t.astype(jnp.float32) / t, axis=1)
    return jnp.sum(p_t * (log_p_t - log_p_s)) * t * t / y_s.shape[0]


if __name__ == "__main__":
    T = 4.0
    key = jax.random.PRNGKey(0)

    # Small distillation-logit shapes: [batch, num_classes].
    for (B, C) in [(16, 100), (8, 128)]:
        key, k_s, k_t = jax.random.split(key, 3)
        y_s = jax.random.normal(k_s, (B, C), dtype=jnp.float32)
        y_t = jax.random.normal(k_t, (B, C), dtype=jnp.float32)

        loss = jax.block_until_ready(distill_kl(y_s, y_t, T))
        ref = jax.block_until_ready(_distill_kl_ref(y_s, y_t, T))
        assert jnp.allclose(loss, ref, rtol=1e-4, atol=1e-5), (B, C, loss, ref)

    print("KERNEL_OK")
</pallas_src>

<mosaic_0001>
module attributes {stable_mosaic.version = 11 : i64} {
  func.func @_distill_kl_kernel(%arg0: i32, %arg1: memref<8x100xf32, #tpu.memory_space<vmem>>, %arg2: memref<8x100xf32, #tpu.memory_space<vmem>>, %arg3: memref<8x1xf32, #tpu.memory_space<vmem>>) attributes {dimension_semantics = [#tpu.dimension_semantics<parallel>], iteration_bounds = array<i64: 2>, scalar_prefetch = 0 : i64, scratch_operands = 0 : i64, tpu.core_type = #tpu.core_type<tc>, window_params = [{transform_indices = @transform_0, window_bounds = array<i64: 8, 100>}, {transform_indices = @transform_1, window_bounds = array<i64: 8, 100>}, {transform_indices = @transform_2, window_bounds = array<i64: 8, 1>}]} {
    %c0 = arith.constant 0 : index
    %c0_0 = arith.constant 0 : index
    %0 = vector.load %arg1[%c0, %c0_0] : memref<8x100xf32, #tpu.memory_space<vmem>>, vector<8x100xf32>
    %cst = arith.constant 2.500000e-01 : f32
    %1 = vector.broadcast %cst : f32 to vector<8x100xf32>
    %2 = arith.mulf %0, %1 : vector<8x100xf32>
    %c0_1 = arith.constant 0 : index
    %c0_2 = arith.constant 0 : index
    %3 = vector.load %arg2[%c0_1, %c0_2] : memref<8x100xf32, #tpu.memory_space<vmem>>, vector<8x100xf32>
    %cst_3 = arith.constant 2.500000e-01 : f32
    %4 = vector.broadcast %cst_3 : f32 to vector<8x100xf32>
    %5 = arith.mulf %3, %4 : vector<8x100xf32>
    %cst_4 = arith.constant dense<0xFF800000> : vector<8xf32>
    %6 = vector.multi_reduction <maximumf>, %2, %cst_4 [1] : vector<8x100xf32> to vector<8xf32>
    %7 = vector.shape_cast %6 : vector<8xf32> to vector<8x1xf32>
    %8 = vector.broadcast %7 : vector<8x1xf32> to vector<8x100xf32>
    %9 = arith.subf %2, %8 : vector<8x100xf32>
    %cst_5 = arith.constant dense<0xFF800000> : vector<8xf32>
    %10 = vector.multi_reduction <maximumf>, %5, %cst_5 [1] : vector<8x100xf32> to vector<8xf32>
    %11 = vector.shape_cast %10 : vector<8xf32> to vector<8x1xf32>
    %12 = vector.broadcast %11 : vector<8x1xf32> to vector<8x100xf32>
    %13 = arith.subf %5, %12 : vector<8x100xf32>
    %14 = math.exp %9 : vector<8x100xf32>
    %cst_6 = arith.constant dense<0.000000e+00> : vector<8xf32>
    %15 = vector.multi_reduction <add>, %14, %cst_6 [1] : vector<8x100xf32> to vector<8xf32>
    %16 = vector.shape_cast %15 : vector<8xf32> to vector<8x1xf32>
    %17 = math.exp %13 : vector<8x100xf32>
    %cst_7 = arith.constant dense<0.000000e+00> : vector<8xf32>
    %18 = vector.multi_reduction <add>, %17, %cst_7 [1] : vector<8x100xf32> to vector<8xf32>
    %19 = vector.shape_cast %18 : vector<8xf32> to vector<8x1xf32>
    %20 = arith.subf %13, %9 : vector<8x100xf32>
    %21 = arith.mulf %17, %20 : vector<8x100xf32>
    %cst_8 = arith.constant dense<0.000000e+00> : vector<8xf32>
    %22 = vector.multi_reduction <add>, %21, %cst_8 [1] : vector<8x100xf32> to vector<8xf32>
    %23 = vector.shape_cast %22 : vector<8xf32> to vector<8x1xf32>
    %24 = tpu.reciprocal %19 : vector<8x1xf32> -> vector<8x1xf32>
    %25 = arith.mulf %23, %24 : vector<8x1xf32>
    %26 = math.log %16 : vector<8x1xf32>
    %27 = arith.addf %25, %26 : vector<8x1xf32>
    %28 = math.log %19 : vector<8x1xf32>
    %29 = arith.subf %27, %28 : vector<8x1xf32>
    %c0_9 = arith.constant 0 : index
    %c0_10 = arith.constant 0 : index
    %30 = vector.load %arg3[%c0_9, %c0_10] : memref<8x1xf32, #tpu.memory_space<vmem>>, vector<8x1xf32>
    tpu.vector_store %arg3[%c0_9, %c0_10], %29 {strides = array<i32>} : memref<8x1xf32, #tpu.memory_space<vmem>>, vector<8x1xf32>,
    return
  }
  func.func @transform_0(%arg0: i32) -> (i32, i32) {
    %c0_i32 = arith.constant 0 : i32
    %c0_i32_0 = arith.constant 0 : i32
    return %arg0, %c0_i32 : i32, i32
  }
  func.func @transform_1(%arg0: i32) -> (i32, i32) {
    %c0_i32 = arith.constant 0 : i32
    %c0_i32_0 = arith.constant 0 : i32
    return %arg0, %c0_i32 : i32, i32
  }
  func.func @transform_2(%arg0: i32) -> (i32, i32) {
    %c0_i32 = arith.constant 0 : i32
    %c0_i32_0 = arith.constant 0 : i32
    return %arg0, %c0_i32 : i32, i32
  }
}

</mosaic_0001>

<llo_original>
// kernel: tpu_custom_call.1
$region0: #{tpu_custom_call.1}
  #allocation0 [shape = 'u32[]', space=smem, size = 0x4, offset = 0x4, fixed_abs, tag = 'smem constant byte address 0x4 - core index']
  #allocation1 [shape = 'u32[144,128]{1,0:T(1,128)}', space=vmem, size = 0x12000, scoped, tag = 'internal scratch']
  %s0 = inlined_call_operand.hbm [shape: f32[16,100], index: 0, kind: input, shape index: {}]
  %s1 = inlined_call_operand.hbm [shape: f32[16,100], index: 1, kind: input, shape index: {}]
  %s2 = inlined_call_operand.vmem [shape: f32[16,1], index: 2, kind: output, shape index: {}]
  %s3 = sld [smem:[#allocation0]]
  $region49: #{tpu_custom_call.1} parent=0
    _
  %s5 = ssub.s32 1, %s3
  %s6 = scalar_select 0, %s5, %s3
  $region1: #{tpu_custom_call.1} parent=0
    #allocation2 [shape = 'u8[8192]{0}', space=vmem, size = 0x2000, scoped, tag = 'input window, operand 0']
    #allocation3 [shape = 's32[2]{0}', space=sflag, size = 0x8, scoped, tag = 'scoped memory for tpu_custom_call.1']
    #allocation4 [shape = 'u8[8192]{0}', space=vmem, size = 0x2000, scoped, tag = 'input window, operand 1']
    #allocation5 [shape = 's32[2]{0}', space=sflag, size = 0x8, scoped, tag = 'scoped memory for tpu_custom_call.1']
    %7 = vsyncpa [#allocation3], 0
    %s8 = scalar_lea.sflag [#allocation3], 1
    %9 = vsyncpa %s8, 0
    %10 = vsyncpa [#allocation5], 0
    %s11 = scalar_lea.sflag [#allocation5], 1
    %12 = vsyncpa %s11, 0
    loop: start=0, step=1, limit=4
    $region2: #{tpu_custom_call.1} parent=1 // loop_pre_header
      _
    $region3: #{tpu_custom_call.1} parent=1 // loop_header
      %s14 = sphi 0, %s18
      %p15 = scmp.ge.s32.totalorder %s14, 4
      %s24 = sphi 0, %s26
      %s27 = sphi 0, %s24
      %s28 = sphi 0, %s27
      %s44 = sphi 0, %s28
      %s50 = sphi 0, %s52
      %s53 = sphi 0, %s50
      %s54 = sphi 0, %s53
      %s70 = sphi 0, %s54
      %s76 = sphi 0, %s78
      %s79 = sphi 0, %s76
      %s80 = sphi 0, %s79
      %s96 = sphi 0, %s80
    $region4: #{tpu_custom_call.1} parent=1 // loop_header_branch
      %17 = sbr.rel (%p15) target = $region8
    $region5: #{tpu_custom_call.1} parent=1 // loop_body
      %s19 = ssub.s32 %s14, 1
      %s20 = ssub.s32 %s14, 2
      %s21 = sadd.s32 %s14, 1
      %s22 = ssub.s32 %s14, %s21
      %p23 = scmp.eq.s32.totalorder %s22, 0
      %s25 = sadd.s32 %s24, 1
      %s26 = scalar_select %p23, %s24, %s25
      %p29 = pneg %p23
      %p30 = scmp.eq.s32.totalorder %s14, 1
      %p31 = por %p29, %p30
      %p32 = scmp.ne.s32.totalorder %s24, %s27
      %p33 = scmp.eq.s32.totalorder %s14, 0
      %p34 = por %p32, %p33
      %p35 = scmp.ne.s32.totalorder %s24, %s27
      %p36 = scmp.eq.s32.totalorder %s19, 1
      %p37 = por %p35, %p36
      %p38 = scmp.ne.s32.totalorder %s27, %s28
      %p39 = scmp.eq.s32.totalorder %s19, 0
      %p40 = por %p38, %p39
      %p41 = scmp.ne.s32.totalorder %s27, %s28
      %p42 = scmp.eq.s32.totalorder %s20, 1
      %p43 = por %p41, %p42
      %p45 = scmp.ne.s32.totalorder %s28, %s44
      %p46 = scmp.eq.s32.totalorder %s20, 0
      %p47 = por %p45, %p46
      %s48 = ssub.s32 %s14, %s21
      %p49 = scmp.eq.s32.totalorder %s48, 0
      %s51 = sadd.s32 %s50, 1
      %s52 = scalar_select %p49, %s50, %s51
      %p55 = pneg %p49
      %p56 = scmp.eq.s32.totalorder %s14, 1
      %p57 = por %p55, %p56
      %p58 = scmp.ne.s32.totalorder %s50, %s53
      %p59 = scmp.eq.s32.totalorder %s14, 0
      %p60 = por %p58, %p59
      %p61 = scmp.ne.s32.totalorder %s50, %s53
      %p62 = scmp.eq.s32.totalorder %s19, 1
      %p63 = por %p61, %p62
      %p64 = scmp.ne.s32.totalorder %s53, %s54
      %p65 = scmp.eq.s32.totalorder %s19, 0
      %p66 = por %p64, %p65
      %p67 = scmp.ne.s32.totalorder %s53, %s54
      %p68 = scmp.eq.s32.totalorder %s20, 1
      %p69 = por %p67, %p68
      %p71 = scmp.ne.s32.totalorder %s54, %s70
      %p72 = scmp.eq.s32.totalorder %s20, 0
      %p73 = por %p71, %p72
      %s74 = ssub.s32 %s14, %s21
      %p75 = scmp.eq.s32.totalorder %s74, 0
      %s77 = sadd.s32 %s76, 1
      %s78 = scalar_select %p75, %s76, %s77
      %p81 = pneg %p75
      %p82 = scmp.eq.s32.totalorder %s14, 1
      %p83 = por %p81, %p82
      %p84 = scmp.ne.s32.totalorder %s76, %s79
      %p85 = scmp.eq.s32.totalorder %s14, 0
      %p86 = por %p84, %p85
      %p87 = scmp.ne.s32.totalorder %s76, %s79
      %p88 = scmp.eq.s32.totalorder %s19, 1
      %p89 = por %p87, %p88
      %p90 = scmp.ne.s32.totalorder %s79, %s80
      %p91 = scmp.eq.s32.totalorder %s19, 0
      %p92 = por %p90, %p91
      %p93 = scmp.ne.s32.totalorder %s79, %s80
      %p94 = scmp.eq.s32.totalorder %s20, 1
      %p95 = por %p93, %p94
      %p97 = scmp.ne.s32.totalorder %s80, %s96
      %p98 = scmp.eq.s32.totalorder %s20, 0
      %p99 = por %p97, %p98
      %p100 = scmp.le.s32.totalorder 1, %s14
      %p101 = scmp.lt.s32.totalorder %s14, 3
      %p102 = pnand %p100, %p101
      %p103 = pneg %p102
      // Predicated region
      $region9: #{tpu_custom_call.1} parent=5 // pred_check
        _
      $region10: #{tpu_custom_call.1} parent=5 // pred_check_branch
        %105 = sbr.rel (%p102) target = $region12
      $region11: #{tpu_custom_call.1} parent=5 // pred_region
        %s106 = ssub.s32 %s14, 1
      $region12: #{tpu_custom_call.1} parent=5 // pred_fallthru
        _
      %p107 = scmp.lt.s32.totalorder %s14, 2
      // Predicated region
      $region13: #{tpu_custom_call.1} parent=5 // pred_check
        %p108 = pneg %p107
      $region14: #{tpu_custom_call.1} parent=5 // pred_check_branch
        %110 = sbr.rel (%p108) target = $region16
      $region15: #{tpu_custom_call.1} parent=5 // pred_region
        // Predicated region
        $region17: #{tpu_custom_call.1} parent=15 // pred_check
          %p111 = pneg %p34
        $region18: #{tpu_custom_call.1} parent=15 // pred_check_branch
          %113 = sbr.rel (%p111) target = $region20
        $region19: #{tpu_custom_call.1} parent=15 // pred_region
          %s114 = sand.u32 %s24, 1
          %s115 = scalar_lea.sflag [#allocation3], %s114
          %s116 = sand.u32 %s24, 1
          %s117 = smul.addr %s116, 8
          %s118 = scalar_lea.vmem [#allocation2], %s117
          %s120 = ssub.s32 128, 128
          %121 = vsyncadd %s115, %s120
          %s122 = smul.addr %s14, 128
          %s123 = scalar_lea.hbm %s0, %s122
          %s125 = sshll.u32 %s118, 4
          %s126 = int_to_ptr.vmem [resolvable:$true] %s125
          %128 = dma.hbm_to_vmem [thread:$0]  %s123, 128, %s126, %s115
        $region20: #{tpu_custom_call.1} parent=15 // pred_fallthru
          _
        // Predicated region
        $region21: #{tpu_custom_call.1} parent=15 // pred_check
          %p129 = pneg %p60
        $region22: #{tpu_custom_call.1} parent=15 // pred_check_branch
          %131 = sbr.rel (%p129) target = $region24
        $region23: #{tpu_custom_call.1} parent=15 // pred_region
          %s132 = sand.u32 %s50, 1
          %s133 = scalar_lea.sflag [#allocation5], %s132
          %s134 = sand.u32 %s50, 1
          %s135 = smul.addr %s134, 8
          %s136 = scalar_lea.vmem [#allocation4], %s135
          %s138 = ssub.s32 128, 128
          %139 = vsyncadd %s133, %s138
          %s140 = smul.addr %s14, 128
          %s141 = scalar_lea.hbm %s1, %s140
          %s143 = sshll.u32 %s136, 4
          %s144 = int_to_ptr.vmem [resolvable:$true] %s143
          %146 = dma.hbm_to_vmem [thread:$0]  %s141, 128, %s144, %s133
        $region24: #{tpu_custom_call.1} parent=15 // pred_fallthru
          _
      $region16: #{tpu_custom_call.1} parent=5 // pred_fallthru
        _
      %p147 = scmp.le.s32.totalorder 1, %s14
      %p148 = scmp.lt.s32.totalorder %s14, 3
      %p149 = pnand %p147, %p148
      %p150 = pneg %p149
      // Predicated region
      $region25: #{tpu_custom_call.1} parent=5 // pred_check
        _
      $region26: #{tpu_custom_call.1} parent=5 // pred_check_branch
        %152 = sbr.rel (%p149) target = $region28
      $region27: #{tpu_custom_call.1} parent=5 // pred_region
        %s153 = ssub.s32 %s14, 1
        %s154 = sand.u32 %s27, 1
        %s155 = scalar_lea.sflag [#allocation3], %s154
        %s156 = sand.u32 %s27, 1
        %s157 = smul.addr %s156, 8
        %s158 = scalar_lea.vmem [#allocation2], %s157
        // Predicated region
        $region29: #{tpu_custom_call.1} parent=27 // pred_check
          %p159 = pneg %p40
        $region30: #{tpu_custom_call.1} parent=27 // pred_check_branch
          %161 = sbr.rel (%p159) target = $region32
        $region31: #{tpu_custom_call.1} parent=27 // pred_region
          %162 = dma.done %s155, 128
        $region32: #{tpu_custom_call.1} parent=27 // pred_fallthru
          _
        %s163 = sand.u32 %s53, 1
        %s164 = scalar_lea.sflag [#allocation5], %s163
        %s165 = sand.u32 %s53, 1
        %s166 = smul.addr %s165, 8
        %s167 = scalar_lea.vmem [#allocation4], %s166
        // Predicated region
        $region33: #{tpu_custom_call.1} parent=27 // pred_check
          %p168 = pneg %p66
        $region34: #{tpu_custom_call.1} parent=27 // pred_check_branch
          %170 = sbr.rel (%p168) target = $region36
        $region35: #{tpu_custom_call.1} parent=27 // pred_region
          %171 = dma.done %s164, 128
        $region36: #{tpu_custom_call.1} parent=27 // pred_fallthru
          _
        %s172 = sand.u32 %s27, 1
        %s173 = scalar_lea.sflag [#allocation3], %s172
        %s174 = sand.u32 %s27, 1
        %s175 = smul.addr %s174, 8
        %s176 = scalar_lea.vmem [#allocation2], %s175
        %p177 = pneg %p40
        %p178 = pneg %p37
        %s179 = sand.u32 %s53, 1
        %s180 = scalar_lea.sflag [#allocation5], %s179
        %s181 = sand.u32 %s53, 1
        %s182 = smul.addr %s181, 8
        %s183 = scalar_lea.vmem [#allocation4], %s182
        %p184 = pneg %p66
        %p185 = pneg %p63
        %p186 = pneg %p92
        %p187 = pneg %p89
        %p188 = scmp.lt.s32.totalorder %s19, 1
        %s189 = scalar_select %p188, %s19, 1
        %s190 = smul.addr %s189, 8
        %s191 = scalar_lea.vmem %s2, %s190
        %p192 = scmp.lt.s32.totalorder %s19, 1
        %s193 = scalar_select %p192, %s19, 1
        %s194 = smul.addr %s193, 8
        %s195 = scalar_lea.vmem %s2, %s194
        %v196 = vld [vmem:[%s158] sm:$0xff]
        %v197 = vmul.f32 %v196, 0.25
        %v198 = vld [vmem:[%s167] sm:$0xff]
        %v199 = vmul.f32 %v198, 0.25
        %vm200 = vcmask 818176
        %v201 = vsel %vm200, %v197, -inf
        %202 = vmax.xlane.f32.xlu0 %v201
        %v203 = vpop.xlane.xlu0 %202
        %v204 = vsub.f32 %v197, %v203
        %v205 = vsel %vm200, %v199, -inf
        %206 = vmax.xlane.f32.xlu0 %v205
        %v207 = vpop.xlane.xlu0 %206
        %v208 = vsub.f32 %v199, %v207
        %v209 = vmul.f32 %v204, 1.442695
        %v210 = vpow.pop %v209
        %v211 = vsel %vm200, %v210, 0.0
        %212 = vadd.xlane.f32.xlu0 %v211
        %v213 = vpop.xlane.xlu0 %212
        %v214 = vmul.f32 %v208, 1.442695
        %v215 = vpow.pop %v214
        %v216 = vsel %vm200, %v215, 0.0
        %217 = vadd.xlane.f32.xlu0 %v216
        %v218 = vpop.xlane.xlu0 %217
        %v219 = vsub.f32 %v208, %v204
        %v220 = vmul.f32 %v215, %v219
        %v221 = vsel %vm200, %v220, 0.0
        %222 = vadd.xlane.f32.xlu0 %v221
        %v223 = vpop.xlane.xlu0 %222
        %v224 = vrcp.pop %v218
        %v225 = vmul.f32 %v223, %v224
        %v226 = vlog2.pop %v213
        %v227 = vmul.f32 %v226, 0.6931472
        %v228 = vadd.f32 %v225, %v227
        %v229 = vlog2.pop %v218
        %v230 = vmul.f32 %v229, 0.6931472
        %v231 = vsub.f32 %v228, %v230
        %vm232 = vcmask 7168
        %233 = vst.msk [vmem:[%s195] sm:$0xff] %vm232, %v231
        %p234 = scmp.lt.s32.totalorder %s19, 1
        %s235 = scalar_select %p234, %s19, 1
        %s236 = smul.addr %s235, 8
        %s237 = scalar_lea.vmem %s2, %s236
        // Predicated region
        $region37: #{tpu_custom_call.1} parent=27 // pred_check
          %p238 = pneg %p89
        $region38: #{tpu_custom_call.1} parent=27 // pred_check_branch
          %240 = sbr.rel (%p238) target = $region40
        $region39: #{tpu_custom_call.1} parent=27 // pred_region
          _
        $region40: #{tpu_custom_call.1} parent=27 // pred_fallthru
          _
      $region28: #{tpu_custom_call.1} parent=5 // pred_fallthru
        _
      %p241 = scmp.le.s32.totalorder 2, %s14
      // Predicated region
      $region41: #{tpu_custom_call.1} parent=5 // pred_check
        %p242 = pneg %p241
      $region42: #{tpu_custom_call.1} parent=5 // pred_check_branch
        %244 = sbr.rel (%p242) target = $region44
      $region43: #{tpu_custom_call.1} parent=5 // pred_region
        %s245 = ssub.s32 %s14, 2
        // Predicated region
        $region45: #{tpu_custom_call.1} parent=43 // pred_check
          %p246 = pneg %p95
        $region46: #{tpu_custom_call.1} parent=43 // pred_check_branch
          %248 = sbr.rel (%p246) target = $region48
        $region47: #{tpu_custom_call.1} parent=43 // pred_region
          %p249 = scmp.lt.s32.totalorder %s20, 1
          %s250 = scalar_select %p249, %s20, 1
          %s251 = smul.addr %s250, 8
          %s252 = scalar_lea.vmem %s2, %s251
        $region48: #{tpu_custom_call.1} parent=43 // pred_fallthru
          _
      $region44: #{tpu_custom_call.1} parent=5 // pred_fallthru
        _
    $region6: #{tpu_custom_call.1} parent=1 // loop_footer
      %s18 = sadd.s32 1, %s14
    $region7: #{tpu_custom_call.1} parent=1 // loop_footer_branch
      %13 = sbr.rel target = $region3
    $region8: #{tpu_custom_call.1} parent=1 // loop_exit
      _
    %253 = vsyncpa [#allocation3], 1
    %s254 = scalar_lea.sflag [#allocation3], 1
    %255 = vsyncpa %s254, 1
    %256 = vsyncpa [#allocation5], 1
    %s257 = scalar_lea.sflag [#allocation5], 1
    %258 = vsyncpa %s257, 1

</llo_original>
